<compile_context>
chip_gen: v6e
topology: v6e:2x2x1
jax: 0.10.0
libtpu: 0.0.40
codegen_flags: <defaults>
</compile_context>

<pallas_src>
import functools

import jax
import jax.numpy as jnp
from jax.experimental import pallas as pl
from jax.experimental.pallas import tpu as pltpu


# ------------------------------ tiling helpers ------------------------------
def _round_up(n, m):
    return ((n + m - 1) // m) * m


def _sublane(dtype):
    # Minimum sublane tile per dtype width: f32 -> 8, bf16 -> 16, i8/fp8 -> 32.
    return {4: 8, 2: 16, 1: 32}.get(jnp.dtype(dtype).itemsize, 8)


def _pad_rows(x2, block_m, sublane):
    """Pick a dtype-aligned row tile and pad the row axis to a multiple."""
    rows = x2.shape[0]
    bm = _round_up(min(block_m, _round_up(rows, sublane)), sublane)
    rows_p = _round_up(rows, bm)
    if rows_p != rows:
        x2 = jnp.pad(x2, ((0, rows_p - rows), (0, 0)))
    return bm, rows_p, x2


def _pad_axis(a, axis, to):
    cur = a.shape[axis]
    if cur == to:
        return a
    pad = [(0, 0)] * a.ndim
    pad[axis] = (0, to - cur)
    return jnp.pad(a, pad)


def _pick_tile_128(total_p, preferred):
    """Largest multiple of 128 <= preferred that divides total_p (which is
    itself a multiple of 128).  128 always works -> tiles stay lane-dense."""
    best = 128
    t = 256
    while t <= min(preferred, total_p):
        if total_p % t == 0:
            best = t
        t += 128
    return best


def _vmem_limit_bytes(resident_estimate):
    """Generation-aware scoped-VMEM request (<= ~3/4 of physical VMEM; never
    below the estimated resident set)."""
    try:
        cap = int(pltpu.get_tpu_info().vmem_capacity_bytes) * 3 // 4
    except Exception:  # conservative default: fits v7x's 64 MiB parts
        cap = 48 * 1024 * 1024
    lim = min(max(int(resident_estimate * 1.25), 16 * 1024 * 1024), cap)
    return max(lim, int(resident_estimate) + (1 << 20))


# ----------------------- fused LayerNorm + Linear kernel ---------------------
def _prenorm_linear_kernel(x_ref, g_ref, b_ref, w_ref, bias_ref, o_ref,
                           normed_ref, acc_ref, *, eps, block_k, d_true,
                           hoist_ln):
    # grid = (row tiles i, N tiles j, K tiles k); k innermost (reduction).
    j = pl.program_id(1)
    k = pl.program_id(2)
    ln_now = ((j == 0) & (k == 0)) if hoist_ln else (k == 0)

    @pl.when(ln_now)
    def _():
        # LayerNorm over the TRUE feature width d_true (feature padding is
        # zero-filled; gamma/beta padding is zero so padded columns norm to 0).
        x = x_ref[...].astype(jnp.float32)                   # (bm, d_in_p)
        n_pad = x.shape[-1] - d_true
        mean = jnp.sum(x, axis=-1, keepdims=True) * (1.0 / d_true)
        xc = x - mean
        var = jnp.sum(xc * xc, axis=-1, keepdims=True)
        if n_pad:
            var = var - n_pad * (mean * mean)
        var = var * (1.0 / d_true)
        inv = jax.lax.rsqrt(var + eps)
        normed = xc * inv * g_ref[...] + b_ref[...]          # gamma/beta f32
        normed_ref[...] = normed.astype(normed_ref.dtype)    # MXU input dtype

    @pl.when(k == 0)
    def _():
        acc_ref[...] = jnp.zeros_like(acc_ref)

    off = pl.multiple_of(k * block_k, block_k)
    acc_ref[...] += jnp.dot(normed_ref[:, pl.ds(off, block_k)], w_ref[...],
                            preferred_element_type=jnp.float32)

    @pl.when(k == pl.num_programs(2) - 1)
    def _():
        o_ref[...] = (acc_ref[...] + bias_ref[...]).astype(o_ref.dtype)


def prenorm_linear(x2, gamma, beta, w, bias, *, eps=1e-5,
                   block_m=128, block_n=256, block_k=1024):
    """Fused LayerNorm(x2) @ w + bias.  x2: (rows, d_in); w: (d_in, d_out)."""
    rows, d_in = x2.shape
    d_out = w.shape[1]
    d_in_p = _round_up(d_in, 128)
    d_out_p = _round_up(d_out, 128)

    sub = _sublane(x2.dtype)
    bm, rows_p, x_p = _pad_rows(x2, block_m, sub)
    x_p = _pad_axis(x_p, 1, d_in_p)

    bn = _pick_tile_128(d_out_p, block_n)
    bk = _pick_tile_128(d_in_p, block_k)
    grid = (rows_p // bm, d_out_p // bn, d_in_p // bk)

    # Hoist LN out of the N loop unless that would starve a TensorCore
    # (single row tile but multiple N tiles -> keep per-j LN, shard j).
    hoist_ln = (grid[0] >= 2) or (grid[1] == 1)
    dims = (("parallel", "arbitrary", "arbitrary") if hoist_ln
            else ("parallel", "parallel", "arbitrary"))

    g2 = _pad_axis(gamma.astype(jnp.float32).reshape(1, d_in), 1, d_in_p)
    be2 = _pad_axis(beta.astype(jnp.float32).reshape(1, d_in), 1, d_in_p)
    w_p = _pad_axis(_pad_axis(w, 0, d_in_p), 1, d_out_p)
    bias2 = _pad_axis(bias.astype(jnp.float32).reshape(1, d_out), 1, d_out_p)

    x_itm = jnp.dtype(x2.dtype).itemsize
    w_itm = jnp.dtype(w.dtype).itemsize
    est = (2 * bm * d_in_p * x_itm          # x tile (double-buffered)
           + 2 * 2 * d_in_p * 4             # gamma / beta
           + 2 * bk * bn * w_itm            # weight tile
           + 2 * 2 * bn * 4                 # bias tile
           + 2 * bm * bn * x_itm            # output tile
           + bm * d_in_p * w_itm            # normed scratch
           + bm * bn * 4)                   # f32 accumulator
    vmem_limit = _vmem_limit_bytes(est)

    cost = pl.CostEstimate(
        flops=2 * rows * d_in * d_out,
        transcendentals=rows,  # one rsqrt per row (LN computed once per row)
        bytes_accessed=(rows_p * d_in_p * x_itm + d_in_p * d_out_p * w_itm
                        + rows_p * d_out_p * x_itm + (2 * d_in_p + d_out_p) * 4))

    kernel = functools.partial(_prenorm_linear_kernel, eps=eps, block_k=bk,
                               d_true=d_in, hoist_ln=hoist_ln)
    out = pl.pallas_call(
        kernel,
        out_shape=jax.ShapeDtypeStruct((rows_p, d_out_p), x2.dtype),
        grid_spec=pltpu.PrefetchScalarGridSpec(
            num_scalar_prefetch=0,
            grid=grid,
            in_specs=[
                pl.BlockSpec((bm, d_in_p), lambda i, j, k: (i, 0)),  # full row
                pl.BlockSpec((1, d_in_p), lambda i, j, k: (0, 0)),   # gamma
                pl.BlockSpec((1, d_in_p), lambda i, j, k: (0, 0)),   # beta
                pl.BlockSpec((bk, bn), lambda i, j, k: (k, j)),      # W tile
                pl.BlockSpec((1, bn), lambda i, j, k: (0, j)),       # bias
            ],
            out_specs=pl.BlockSpec((bm, bn), lambda i, j, k: (i, j)),
            scratch_shapes=[
                pltpu.VMEM((bm, d_in_p), w.dtype),    # normalized rows
                pltpu.VMEM((bm, bn), jnp.float32),    # K-reduction accumulator
            ],
        ),
        compiler_params=pltpu.CompilerParams(
            dimension_semantics=dims,
            vmem_limit_bytes=vmem_limit,
        ),
        cost_estimate=cost,
    )(x_p, g2, be2, w_p, bias2)
    return out[:rows, :d_out]


# ------------------------ standalone LayerNorm kernel ------------------------
def _layernorm_kernel(x_ref, g_ref, b_ref, o_ref, *, eps):
    x = x_ref[...].astype(jnp.float32)
    mean = jnp.mean(x, axis=-1, keepdims=True)
    xc = x - mean
    var = jnp.mean(xc * xc, axis=-1, keepdims=True)
    inv = jax.lax.rsqrt(var + eps)
    o_ref[...] = (xc * inv * g_ref[...] + b_ref[...]).astype(o_ref.dtype)


def layer_norm(x2, gamma, beta, *, eps=1e-5, block_m=128):
    """Row-tiled LayerNorm over the last axis.  x2: (rows, D)."""
    rows, d = x2.shape
    bm, rows_p, x_p = _pad_rows(x2, block_m, _sublane(x2.dtype))
    g2 = gamma.reshape(1, d).astype(jnp.float32)
    b2 = beta.reshape(1, d).astype(jnp.float32)
    itm = jnp.dtype(x2.dtype).itemsize
    est = 2 * 2 * bm * d * itm + 2 * 2 * d * 4   # in/out double-buffered + params
    out = pl.pallas_call(
        functools.partial(_layernorm_kernel, eps=eps),
        out_shape=jax.ShapeDtypeStruct((rows_p, d), x2.dtype),
        grid_spec=pltpu.PrefetchScalarGridSpec(
            num_scalar_prefetch=0,
            grid=(rows_p // bm,),
            in_specs=[
                pl.BlockSpec((bm, d), lambda i: (i, 0)),
                pl.BlockSpec((1, d), lambda i: (0, 0)),
                pl.BlockSpec((1, d), lambda i: (0, 0)),
            ],
            out_specs=pl.BlockSpec((bm, d), lambda i: (i, 0)),
        ),
        compiler_params=pltpu.CompilerParams(
            dimension_semantics=("parallel",),
            vmem_limit_bytes=_vmem_limit_bytes(est)),
    )(x_p, g2, b2)
    return out[:rows]


# --------------------------- standalone Linear kernel ------------------------
def _linear_kernel(x_ref, w_ref, b_ref, o_ref, acc_ref):
    k = pl.program_id(2)

    @pl.when(k == 0)
    def _():
        acc_ref[...] = jnp.zeros_like(acc_ref)

    acc_ref[...] += jnp.dot(x_ref[...], w_ref[...],
                            preferred_element_type=jnp.float32)

    @pl.when(k == pl.num_programs(2) - 1)
    def _():
        o_ref[...] = (acc_ref[...] + b_ref[...]).astype(o_ref.dtype)


def linear(x2, w, b, *, block_m=128, block_n=256, block_k=1024):
    rows, d_in = x2.shape
    d_out = w.shape[1]
    d_in_p = _round_up(d_in, 128)
    d_out_p = _round_up(d_out, 128)

    bm, rows_p, x_p = _pad_rows(x2, block_m, _sublane(x2.dtype))
    x_p = _pad_axis(x_p, 1, d_in_p)
    bn = _pick_tile_128(d_out_p, block_n)
    bk = _pick_tile_128(d_in_p, block_k)
    grid = (rows_p // bm, d_out_p // bn, d_in_p // bk)

    w_p = _pad_axis(_pad_axis(w, 0, d_in_p), 1, d_out_p)
    b2 = _pad_axis(b.reshape(1, d_out).astype(jnp.float32), 1, d_out_p)

    x_itm = jnp.dtype(x2.dtype).itemsize
    w_itm = jnp.dtype(w.dtype).itemsize
    est = (2 * bm * bk * x_itm + 2 * bk * bn * w_itm + 2 * 2 * bn * 4
           + 2 * bm * bn * x_itm + bm * bn * 4)
    out = pl.pallas_call(
        _linear_kernel,
        out_shape=jax.ShapeDtypeStruct((rows_p, d_out_p), x2.dtype),
        grid_spec=pltpu.PrefetchScalarGridSpec(
            num_scalar_prefetch=0,
            grid=grid,
            in_specs=[
                pl.BlockSpec((bm, bk), lambda i, j, k: (i, k)),
                pl.BlockSpec((bk, bn), lambda i, j, k: (k, j)),
                pl.BlockSpec((1, bn), lambda i, j, k: (0, j)),
            ],
            out_specs=pl.BlockSpec((bm, bn), lambda i, j, k: (i, j)),
            scratch_shapes=[pltpu.VMEM((bm, bn), jnp.float32)],
        ),
        compiler_params=pltpu.CompilerParams(
            dimension_semantics=("parallel", "parallel", "arbitrary"),
            vmem_limit_bytes=_vmem_limit_bytes(est)),
        cost_estimate=pl.CostEstimate(
            flops=2 * rows * d_in * d_out,
            transcendentals=0,
            bytes_accessed=(rows_p * d_in_p * x_itm + d_in_p * d_out_p * w_itm
                            + rows_p * d_out_p * x_itm)),
    )(x_p, w_p, b2)
    return out[:rows, :d_out]


# --------------------------------- modules ----------------------------------
class Linear:
    """Pallas Linear(D_in -> D_out): y = x @ w + b."""

    def __init__(self, w, b, *, block_sizes=(128, 256, 1024)):
        self.w = w
        self.b = b
        self.block_sizes = block_sizes

    def __call__(self, x):
        d_in = x.shape[-1]
        lead = x.shape[:-1]
        bm, bn, bk = self.block_sizes
        out = linear(x.reshape(-1, d_in), self.w, self.b,
                     block_m=bm, block_n=bn, block_k=bk)
        return out.reshape(*lead, out.shape[-1])


class PreNorm:
    """Pallas equivalent of:  fn(nn.LayerNorm(dim)(x), **kwargs).

    When `fn` is a Pallas Linear (and no extra kwargs), LayerNorm + matmul are
    fused into one kernel (normalized activations never touch HBM); otherwise
    a tiled LayerNorm kernel runs and `fn` is applied to its output.
    """

    def __init__(self, dim, fn, *, eps=1e-5, block_sizes=(128, 256, 1024)):
        self.dim = dim
        self.fn = fn
        self.eps = eps
        self.block_sizes = block_sizes
        # nn.LayerNorm default init: weight=1, bias=0
        self.gamma = jnp.ones((dim,), dtype=jnp.float32)
        self.beta = jnp.zeros((dim,), dtype=jnp.float32)

    def __call__(self, x, **kwargs):
        d = x.shape[-1]
        assert d == self.dim
        lead = x.shape[:-1]
        x2 = x.reshape(-1, d)
        bm, bn, bk = self.block_sizes
        if isinstance(self.fn, Linear) and not kwargs:
            out = prenorm_linear(x2, self.gamma, self.beta,
                                 self.fn.w, self.fn.b, eps=self.eps,
                                 block_m=bm, block_n=bn, block_k=bk)
            return out.reshape(*lead, out.shape[-1])
        normed = layer_norm(x2, self.gamma, self.beta,
                            eps=self.eps, block_m=bm)
        return self.fn(normed.reshape(*lead, d), **kwargs)


# ----------------------------------- test ------------------------------------
if __name__ == "__main__":
    key = jax.random.PRNGKey(0)
    k_x, k_w, k_b, k_w2, k_b2, k_x3, k_w3, k_b3 = jax.random.split(key, 8)

    B, S, D = 2, 16, 256
    x = jax.random.normal(k_x, (B, S, D), dtype=jnp.float32)
    w = jax.random.normal(k_w, (D, D), dtype=jnp.float32) * 0.02
    b = jax.random.normal(k_b, (D,), dtype=jnp.float32) * 0.02

    def ln_ref(xv, g, be, eps=1e-5):
        mu = jnp.mean(xv, axis=-1, keepdims=True)
        var = jnp.mean((xv - mu) ** 2, axis=-1, keepdims=True)
        return (xv - mu) * jax.lax.rsqrt(var + eps) * g + be

    # Small tiles so the (rows, N, K) grid actually has multiple steps.
    blocks = (16, 128, 128)
    fn = Linear(w, b, block_sizes=blocks)
    prenorm = PreNorm(D, fn, block_sizes=blocks)

    out = prenorm(x)                      # fused LayerNorm + Linear (LN hoisted)
    jax.block_until_ready(out)
    ref = ln_ref(x, prenorm.gamma, prenorm.beta) @ w + b
    assert out.shape == (B, S, D)
    assert jnp.allclose(out, ref, atol=5e-3, rtol=5e-3), \
        float(jnp.max(jnp.abs(out - ref)))

    # Non-128-multiple d_out (exercises lane padding of W / bias / output).
    D2 = 192
    w2 = jax.random.normal(k_w2, (D, D2), dtype=jnp.float32) * 0.02
    b2 = jax.random.normal(k_b2, (D2,), dtype=jnp.float32) * 0.02
    pn2 = PreNorm(D, Linear(w2, b2, block_sizes=blocks), block_sizes=blocks)
    out2 = pn2(x)
    jax.block_until_ready(out2)
    ref2 = ln_ref(x, pn2.gamma, pn2.beta) @ w2 + b2
    assert out2.shape == (B, S, D2)
    assert jnp.allclose(out2, ref2, atol=5e-3, rtol=5e-3)

    # Non-128-multiple LayerNorm dim (exercises pad-corrected mean/var).
    D3 = 200
    x3 = jax.random.normal(k_x3, (2, 8, D3), dtype=jnp.float32)
    w3 = jax.random.normal(k_w3, (D3, 128), dtype=jnp.float32) * 0.02
    b3 = jax.random.normal(k_b3, (128,), dtype=jnp.float32) * 0.02
    pn3 = PreNorm(D3, Linear(w3, b3, block_sizes=(8, 128, 128)),
                  block_sizes=(8, 128, 128))
    out3 = pn3(x3)
    jax.block_until_ready(out3)
    ref3 = ln_ref(x3, pn3.gamma, pn3.beta) @ w3 + b3
    assert jnp.allclose(out3, ref3, atol=5e-3, rtol=5e-3)

    # Fallback path: arbitrary (non-Linear) fn -> tiled LayerNorm kernel + fn.
    pn_tanh = PreNorm(D, lambda y: jnp.tanh(y), block_sizes=blocks)
    out4 = pn_tanh(x)
    jax.block_until_ready(out4)
    assert jnp.allclose(out4, jnp.tanh(ln_ref(x, pn_tanh.gamma, pn_tanh.beta)),
                        atol=1e-4, rtol=1e-4)

    # Standalone Pallas Linear kernel.
    out5 = fn(x)
    jax.block_until_ready(out5)
    assert jnp.allclose(out5, x @ w + b, atol=5e-3, rtol=5e-3)

    # bf16 path (exercises dtype-aware sublane padding + bf16 MXU inputs).
    xb = x.astype(jnp.bfloat16)
    wb = w.astype(jnp.bfloat16)
    bb = b.astype(jnp.bfloat16)
    pn_b = PreNorm(D, Linear(wb, bb, block_sizes=blocks), block_sizes=blocks)
    outb = pn_b(xb)
    jax.block_until_ready(outb)
    refb = (ln_ref(xb.astype(jnp.float32), pn_b.gamma, pn_b.beta)
            @ wb.astype(jnp.float32) + bb.astype(jnp.float32))
    assert jnp.allclose(outb.astype(jnp.float32), refb, atol=6e-2, rtol=6e-2)

    print("KERNEL_OK")
</pallas_src>

<mosaic_0001>
module attributes {stable_mosaic.version = 11 : i64} {
  func.func @_prenorm_linear_kernel(%arg0: i32, %arg1: i32, %arg2: i32, %arg3: memref<16x256xf32, #tpu.memory_space<vmem>>, %arg4: memref<1x256xf32, #tpu.memory_space<vmem>>, %arg5: memref<1x256xf32, #tpu.memory_space<vmem>>, %arg6: memref<128x128xf32, #tpu.memory_space<vmem>>, %arg7: memref<1x128xf32, #tpu.memory_space<vmem>>, %arg8: memref<16x128xf32, #tpu.memory_space<vmem>>, %arg9: memref<16x256xf32, #tpu.memory_space<vmem>>, %arg10: memref<16x128xf32, #tpu.memory_space<vmem>>) attributes {dimension_semantics = [#tpu.dimension_semantics<parallel>, #tpu.dimension_semantics<arbitrary>, #tpu.dimension_semantics<arbitrary>], iteration_bounds = array<i64: 2, 2, 2>, scalar_prefetch = 0 : i64, scratch_operands = 2 : i64, tpu.core_type = #tpu.core_type<tc>, window_params = [{transform_indices = @transform_0, window_bounds = array<i64: 16, 256>}, {pipeline_mode = #tpu.pipeline_mode<synchronous>, transform_indices = @transform_1, window_bounds = array<i64: 1, 256>}, {pipeline_mode = #tpu.pipeline_mode<synchronous>, transform_indices = @transform_2, window_bounds = array<i64: 1, 256>}, {transform_indices = @transform_3, window_bounds = array<i64: 128, 128>}, {transform_indices = @transform_4, window_bounds = array<i64: 1, 128>}, {transform_indices = @transform_5, window_bounds = array<i64: 16, 128>}]} {
    %c0_i32 = arith.constant 0 : i32
    %0 = arith.cmpi eq, %arg1, %c0_i32 : i32
    %c0_i32_0 = arith.constant 0 : i32
    %1 = arith.cmpi eq, %arg2, %c0_i32_0 : i32
    %2 = arith.andi %0, %1 : i1
    %3 = arith.extui %2 : i1 to i32
    %c0_i32_1 = arith.constant 0 : i32
    %4 = arith.cmpi ne, %3, %c0_i32_1 : i32
    scf.if %4 {
      %c0_11 = arith.constant 0 : index
      %c0_12 = arith.constant 0 : index
      %20 = vector.load %arg3[%c0_11, %c0_12] : memref<16x256xf32, #tpu.memory_space<vmem>>, vector<16x256xf32>
      %cst_13 = arith.constant dense<0.000000e+00> : vector<16xf32>
      %21 = vector.multi_reduction <add>, %20, %cst_13 [1] : vector<16x256xf32> to vector<16xf32>
      %22 = vector.shape_cast %21 : vector<16xf32> to vector<16x1xf32>
      %cst_14 = arith.constant 3.906250e-03 : f32
      %23 = vector.broadcast %cst_14 : f32 to vector<16x1xf32>
      %24 = arith.mulf %22, %23 : vector<16x1xf32>
      %25 = vector.broadcast %24 : vector<16x1xf32> to vector<16x256xf32>
      %26 = arith.subf %20, %25 : vector<16x256xf32>
      %27 = arith.mulf %26, %26 : vector<16x256xf32>
      %cst_15 = arith.constant dense<0.000000e+00> : vector<16xf32>
      %28 = vector.multi_reduction <add>, %27, %cst_15 [1] : vector<16x256xf32> to vector<16xf32>
      %29 = vector.shape_cast %28 : vector<16xf32> to vector<16x1xf32>
      %cst_16 = arith.constant 3.906250e-03 : f32
      %30 = vector.broadcast %cst_16 : f32 to vector<16x1xf32>
      %31 = arith.mulf %29, %30 : vector<16x1xf32>
      %cst_17 = arith.constant 9.99999974E-6 : f32
      %32 = vector.broadcast %cst_17 : f32 to vector<16x1xf32>
      %33 = arith.addf %31, %32 : vector<16x1xf32>
      %34 = math.rsqrt %33 : vector<16x1xf32>
      %35 = vector.broadcast %34 : vector<16x1xf32> to vector<16x256xf32>
      %36 = arith.mulf %26, %35 : vector<16x256xf32>
      %c0_18 = arith.constant 0 : index
      %c0_19 = arith.constant 0 : index
      %37 = vector.load %arg4[%c0_18, %c0_19] : memref<1x256xf32, #tpu.memory_space<vmem>>, vector<1x256xf32>
      %38 = vector.broadcast %37 : vector<1x256xf32> to vector<16x256xf32>
      %39 = arith.mulf %36, %38 : vector<16x256xf32>
      %c0_20 = arith.constant 0 : index
      %c0_21 = arith.constant 0 : index
      %40 = vector.load %arg5[%c0_20, %c0_21] : memref<1x256xf32, #tpu.memory_space<vmem>>, vector<1x256xf32>
      %41 = vector.broadcast %40 : vector<1x256xf32> to vector<16x256xf32>
      %42 = arith.addf %39, %41 : vector<16x256xf32>
      %c0_22 = arith.constant 0 : index
      %c0_23 = arith.constant 0 : index
      %43 = vector.load %arg9[%c0_22, %c0_23] : memref<16x256xf32, #tpu.memory_space<vmem>>, vector<16x256xf32>
      tpu.vector_store %arg9[%c0_22, %c0_23], %42 {strides = array<i32>} : memref<16x256xf32, #tpu.memory_space<vmem>>, vector<16x256xf32>,
    } else {
    }
    %c0_i32_2 = arith.constant 0 : i32
    %5 = arith.cmpi eq, %arg2, %c0_i32_2 : i32
    %6 = arith.extui %5 : i1 to i32
    %c0_i32_3 = arith.constant 0 : i32
    %7 = arith.cmpi ne, %6, %c0_i32_3 : i32
    scf.if %7 {
      %cst_11 = arith.constant 0.000000e+00 : f32
      %20 = vector.broadcast %cst_11 : f32 to vector<16x128xf32>
      %c0_12 = arith.constant 0 : index
      %c0_13 = arith.constant 0 : index
      %21 = vector.load %arg10[%c0_12, %c0_13] : memref<16x128xf32, #tpu.memory_space<vmem>>, vector<16x128xf32>
      tpu.vector_store %arg10[%c0_12, %c0_13], %20 {strides = array<i32>} : memref<16x128xf32, #tpu.memory_space<vmem>>, vector<16x128xf32>,
    } else {
    }
    %c128_i32 = arith.constant 128 : i32
    %8 = arith.muli %arg2, %c128_i32 : i32
    %9 = tpu.assume_multiple %8, 128 : i32
    %c0 = arith.constant 0 : index
    %c0_4 = arith.constant 0 : index
    %10 = vector.load %arg10[%c0, %c0_4] : memref<16x128xf32, #tpu.memory_space<vmem>>, vector<16x128xf32>
    %c0_5 = arith.constant 0 : index
    %11 = arith.index_cast %9 : i32 to index
    %12 = vector.load %arg9[%c0_5, %11] : memref<16x256xf32, #tpu.memory_space<vmem>>, vector<16x128xf32>
    %c0_6 = arith.constant 0 : index
    %c0_7 = arith.constant 0 : index
    %13 = vector.load %arg6[%c0_6, %c0_7] : memref<128x128xf32, #tpu.memory_space<vmem>>, vector<128x128xf32>
    %cst = arith.constant dense<0.000000e+00> : vector<16x128xf32>
    %14 = tpu.matmul %12, %13, %cst {dimension_numbers = #tpu.dot_dimension_numbers<[1], [0], [0], [1], [0, 0, 1, 1], [], []>} : vector<16x128xf32>, vector<128x128xf32>, vector<16x128xf32> -> vector<16x128xf32>
    %15 = arith.addf %10, %14 : vector<16x128xf32>
    %c0_8 = arith.constant 0 : index
    %c0_9 = arith.constant 0 : index
    %16 = vector.load %arg10[%c0_8, %c0_9] : memref<16x128xf32, #tpu.memory_space<vmem>>, vector<16x128xf32>
    tpu.vector_store %arg10[%c0_8, %c0_9], %15 {strides = array<i32>} : memref<16x128xf32, #tpu.memory_space<vmem>>, vector<16x128xf32>,
    %c1_i32 = arith.constant 1 : i32
    %17 = arith.cmpi eq, %arg2, %c1_i32 : i32
    %18 = arith.extui %17 : i1 to i32
    %c0_i32_10 = arith.constant 0 : i32
    %19 = arith.cmpi ne, %18, %c0_i32_10 : i32
    scf.if %19 {
      %c0_11 = arith.constant 0 : index
      %c0_12 = arith.constant 0 : index
      %20 = vector.load %arg10[%c0_11, %c0_12] : memref<16x128xf32, #tpu.memory_space<vmem>>, vector<16x128xf32>
      %c0_13 = arith.constant 0 : index
      %c0_14 = arith.constant 0 : index
      %21 = vector.load %arg7[%c0_13, %c0_14] : memref<1x128xf32, #tpu.memory_space<vmem>>, vector<1x128xf32>
      %22 = vector.broadcast %21 : vector<1x128xf32> to vector<16x128xf32>
      %23 = arith.addf %20, %22 : vector<16x128xf32>
      %c0_15 = arith.constant 0 : index
      %c0_16 = arith.constant 0 : index
      %24 = vector.load %arg8[%c0_15, %c0_16] : memref<16x128xf32, #tpu.memory_space<vmem>>, vector<16x128xf32>
      tpu.vector_store %arg8[%c0_15, %c0_16], %23 {strides = array<i32>} : memref<16x128xf32, #tpu.memory_space<vmem>>, vector<16x128xf32>,
    } else {
    }
    return
  }
  func.func @transform_0(%arg0: i32, %arg1: i32, %arg2: i32) -> (i32, i32) {
    %c0_i32 = arith.constant 0 : i32
    %c0_i32_0 = arith.constant 0 : i32
    return %arg0, %c0_i32 : i32, i32
  }
  func.func @transform_1(%arg0: i32, %arg1: i32, %arg2: i32) -> (i32, i32) {
    %c0_i32 = arith.constant 0 : i32
    %c0_i32_0 = arith.constant 0 : i32
    %c0_i32_1 = arith.constant 0 : i32
    return %c0_i32, %c0_i32_0 : i32, i32
  }
  func.func @transform_2(%arg0: i32, %arg1: i32, %arg2: i32) -> (i32, i32) {
    %c0_i32 = arith.constant 0 : i32
    %c0_i32_0 = arith.constant 0 : i32
    %c0_i32_1 = arith.constant 0 : i32
    return %c0_i32, %c0_i32_0 : i32, i32
  }
  func.func @transform_3(%arg0: i32, %arg1: i32, %arg2: i32) -> (i32, i32) {
    %c0_i32 = arith.constant 0 : i32
    return %arg2, %arg1 : i32, i32
  }
  func.func @transform_4(%arg0: i32, %arg1: i32, %arg2: i32) -> (i32, i32) {
    %c0_i32 = arith.constant 0 : i32
    %c0_i32_0 = arith.constant 0 : i32
    return %c0_i32, %arg1 : i32, i32
  }
  func.func @transform_5(%arg0: i32, %arg1: i32, %arg2: i32) -> (i32, i32) {
    %c0_i32 = arith.constant 0 : i32
    return %arg0, %arg1 : i32, i32
  }
}

</mosaic_0001>

<llo_original>
// kernel: tpu_custom_call.1
$region0: #{tpu_custom_call.1}
  #allocation0 [shape = 'u32[]', space=smem, size = 0x4, offset = 0x4, fixed_abs, tag = 'smem constant byte address 0x4 - core index']
  #allocation1 [shape = 'u32[144,128]{1,0:T(1,128)}', space=vmem, size = 0x12000, scoped, tag = 'internal scratch']
  #allocation2 [shape = 'f32[16,256]{1,0:T(8,128)}', space=vmem, size = 0x4000, scoped, tag = 'scratch operand']
  #allocation3 [shape = 'f32[16,128]{1,0:T(8,128)}', space=vmem, size = 0x2000, scoped, tag = 'scratch operand']
  %s0 = inlined_call_operand.hbm [shape: f32[32,256], index: 0, kind: input, shape index: {}]
  %s1 = inlined_call_operand.hbm [shape: f32[1,256], index: 1, kind: input, shape index: {}]
  %s2 = inlined_call_operand.vmem [shape: f32[1,256], index: 2, kind: input, shape index: {}]
  %s3 = inlined_call_operand.hbm [shape: f32[256,256], index: 3, kind: input, shape index: {}]
  %s4 = inlined_call_operand.vmem [shape: f32[1,256], index: 4, kind: input, shape index: {}]
  %s5 = inlined_call_operand.hbm [shape: f32[32,256], index: 5, kind: output, shape index: {}]
  %s6 = sld [smem:[#allocation0]]
  $region77: #{tpu_custom_call.1} parent=0
    _
  %s8 = ssub.s32 1, %s6
  %s9 = scalar_select 0, %s8, %s6
  $region1: #{tpu_custom_call.1} parent=0
    #allocation4 [shape = 'u8[32768]{0}', space=vmem, size = 0x8000, scoped, tag = 'input window, operand 0']
    #allocation5 [shape = 's32[2]{0}', space=sflag, size = 0x8, scoped, tag = 'scoped memory for tpu_custom_call.1']
    #allocation6 [shape = 's32[2]{0}', space=sflag, size = 0x8, scoped, tag = 'scoped memory for tpu_custom_call.1']
    #allocation7 [shape = 'u8[1024]{0}', space=vmem, size = 0x400, scoped, tag = 'input window, operand 1, single buffered']
    #allocation8 [shape = 's32[1]{0}', space=sflag, size = 0x4, scoped, tag = 'scoped memory for tpu_custom_call.1']
    #allocation9 [shape = 'u8[131072]{0}', space=vmem, size = 0x20000, scoped, tag = 'input window, operand 3']
    #allocation10 [shape = 'u8[16384]{0}', space=vmem, size = 0x4000, scoped, tag = 'output window, operand 0']
    %10 = vsyncpa [#allocation5], 0
    %s11 = scalar_lea.sflag [#allocation5], 1
    %12 = vsyncpa %s11, 0
    %13 = vsyncpa [#allocation8], 0
    %14 = vsyncpa [#allocation6], 0
    %s15 = scalar_lea.sflag [#allocation6], 1
    %16 = vsyncpa %s15, 0
    loop: start=0, step=1, limit=10
    $region2: #{tpu_custom_call.1} parent=1 // loop_pre_header
      _
    $region3: #{tpu_custom_call.1} parent=1 // loop_header
      %s18 = sphi 0, %s22
      %p19 = scmp.ge.s32.totalorder %s18, 10
      %s25 = sphi 0, %s44
      %s26 = sphi 0, %s40
      %s27 = sphi 0, %s36
      %s28 = sphi 0, %s25
      %s29 = sphi 0, %s26
      %s30 = sphi 0, %s27
      %s31 = sphi 0, %s28
      %s32 = sphi 0, %s29
      %s33 = sphi 0, %s30
      %s47 = sphi 0, %s49
      %s50 = sphi 0, %s47
      %s51 = sphi 0, %s50
      %s67 = sphi 0, %s51
      %s71 = sphi 0, %s71
      %s73 = sphi 0, %s71
      %s74 = sphi 0, %s73
      %s88 = sphi 0, %s74
      %s92 = sphi 0, %s92
      %s94 = sphi 0, %s92
      %s95 = sphi 0, %s94
      %s109 = sphi 0, %s95
      %s117 = sphi 0, %s119
      %s120 = sphi 0, %s117
      %s121 = sphi 0, %s120
      %s137 = sphi 0, %s121
      %s143 = sphi 0, %s145
      %s146 = sphi 0, %s143
      %s147 = sphi 0, %s146
      %s163 = sphi 0, %s147
      %s171 = sphi 0, %s173
      %s174 = sphi 0, %s171
      %s175 = sphi 0, %s174
      %s191 = sphi 0, %s175
    $region4: #{tpu_custom_call.1} parent=1 // loop_header_branch
      %21 = sbr.rel (%p19) target = $region8
    $region5: #{tpu_custom_call.1} parent=1 // loop_body
      %s23 = ssub.s32 %s18, 1
      %s24 = ssub.s32 %s18, 2
      %s34 = sadd.s32 1, %s27
      %p35 = scmp.ge.s32.totalorder %s34, 2
      %s36 = scalar_select %p35, 0, %s34
      %s37 = sadd.s32 1, %s26
      %s38 = scalar_select %p35, %s37, %s26
      %p39 = scmp.ge.s32.totalorder %s38, 2
      %s40 = scalar_select %p39, 0, %s38
      %s41 = sadd.s32 1, %s25
      %s42 = scalar_select %p39, %s41, %s25
      %p43 = scmp.ge.s32.totalorder %s42, 2
      %s44 = scalar_select %p43, 0, %s42
      %s45 = ssub.s32 %s25, %s44
      %p46 = scmp.eq.s32.totalorder %s45, 0
      %s48 = sadd.s32 %s47, 1
      %s49 = scalar_select %p46, %s47, %s48
      %p52 = pneg %p46
      %p53 = scmp.eq.s32.totalorder %s18, 7
      %p54 = por %p52, %p53
      %p55 = scmp.ne.s32.totalorder %s47, %s50
      %p56 = scmp.eq.s32.totalorder %s18, 0
      %p57 = por %p55, %p56
      %p58 = scmp.ne.s32.totalorder %s47, %s50
      %p59 = scmp.eq.s32.totalorder %s23, 7
      %p60 = por %p58, %p59
      %p61 = scmp.ne.s32.totalorder %s50, %s51
      %p62 = scmp.eq.s32.totalorder %s23, 0
      %p63 = por %p61, %p62
      %p64 = scmp.ne.s32.totalorder %s50, %s51
      %p65 = scmp.eq.s32.totalorder %s24, 7
      %p66 = por %p64, %p65
      %p68 = scmp.ne.s32.totalorder %s51, %s67
      %p69 = scmp.eq.s32.totalorder %s24, 0
      %p70 = por %p68, %p69
      %s72 = sadd.s32 %s71, 1
      %p75 = scmp.eq.s32.totalorder %s18, 7
      %p76 = scmp.ne.s32.totalorder %s71, %s73
      %p77 = scmp.eq.s32.totalorder %s18, 0
      %p78 = por %p76, %p77
      %p79 = scmp.ne.s32.totalorder %s71, %s73
      %p80 = scmp.eq.s32.totalorder %s23, 7
      %p81 = por %p79, %p80
      %p82 = scmp.ne.s32.totalorder %s73, %s74
      %p83 = scmp.eq.s32.totalorder %s23, 0
      %p84 = por %p82, %p83
      %p85 = scmp.ne.s32.totalorder %s73, %s74
      %p86 = scmp.eq.s32.totalorder %s24, 7
      %p87 = por %p85, %p86
      %p89 = scmp.ne.s32.totalorder %s74, %s88
      %p90 = scmp.eq.s32.totalorder %s24, 0
      %p91 = por %p89, %p90
      %s93 = sadd.s32 %s92, 1
      %p96 = scmp.eq.s32.totalorder %s18, 7
      %p97 = scmp.ne.s32.totalorder %s92, %s94
      %p98 = scmp.eq.s32.totalorder %s18, 0
      %p99 = por %p97, %p98
      %p100 = scmp.ne.s32.totalorder %s92, %s94
      %p101 = scmp.eq.s32.totalorder %s23, 7
      %p102 = por %p100, %p101
      %p103 = scmp.ne.s32.totalorder %s94, %s95
      %p104 = scmp.eq.s32.totalorder %s23, 0
      %p105 = por %p103, %p104
      %p106 = scmp.ne.s32.totalorder %s94, %s95
      %p107 = scmp.eq.s32.totalorder %s24, 7
      %p108 = por %p106, %p107
      %p110 = scmp.ne.s32.totalorder %s95, %s109
      %p111 = scmp.eq.s32.totalorder %s24, 0
      %p112 = por %p110, %p111
      %s113 = ssub.s32 %s27, %s36
      %s114 = ssub.s32 %s26, %s40
      %s115 = sor.u32 %s113, %s114
      %p116 = scmp.eq.s32.totalorder %s115, 0
      %s118 = sadd.s32 %s117, 1
      %s119 = scalar_select %p116, %s117, %s118
      %p122 = pneg %p116
      %p123 = scmp.eq.s32.totalorder %s18, 7
      %p124 = por %p122, %p123
      %p125 = scmp.ne.s32.totalorder %s117, %s120
      %p126 = scmp.eq.s32.totalorder %s18, 0
      %p127 = por %p125, %p126
      %p128 = scmp.ne.s32.totalorder %s117, %s120
      %p129 = scmp.eq.s32.totalorder %s23, 7
      %p130 = por %p128, %p129
      %p131 = scmp.ne.s32.totalorder %s120, %s121
      %p132 = scmp.eq.s32.totalorder %s23, 0
      %p133 = por %p131, %p132
      %p134 = scmp.ne.s32.totalorder %s120, %s121
      %p135 = scmp.eq.s32.totalorder %s24, 7
      %p136 = por %p134, %p135
      %p138 = scmp.ne.s32.totalorder %s121, %s137
      %p139 = scmp.eq.s32.totalorder %s24, 0
      %p140 = por %p138, %p139
      %s141 = ssub.s32 %s26, %s40
      %p142 = scmp.eq.s32.totalorder %s141, 0
      %s144 = sadd.s32 %s143, 1
      %s145 = scalar_select %p142, %s143, %s144
      %p148 = pneg %p142
      %p149 = scmp.eq.s32.totalorder %s18, 7
      %p150 = por %p148, %p149
      %p151 = scmp.ne.s32.totalorder %s143, %s146
      %p152 = scmp.eq.s32.totalorder %s18, 0
      %p153 = por %p151, %p152
      %p154 = scmp.ne.s32.totalorder %s143, %s146
      %p155 = scmp.eq.s32.totalorder %s23, 7
      %p156 = por %p154, %p155
      %p157 = scmp.ne.s32.totalorder %s146, %s147
      %p158 = scmp.eq.s32.totalorder %s23, 0
      %p159 = por %p157, %p158
      %p160 = scmp.ne.s32.totalorder %s146, %s147
      %p161 = scmp.eq.s32.totalorder %s24, 7
      %p162 = por %p160, %p161
      %p164 = scmp.ne.s32.totalorder %s147, %s163
      %p165 = scmp.eq.s32.totalorder %s24, 0
      %p166 = por %p164, %p165
      %s167 = ssub.s32 %s25, %s44
      %s168 = ssub.s32 %s26, %s40
      %s169 = sor.u32 %s167, %s168
      %p170 = scmp.eq.s32.totalorder %s169, 0
      %s172 = sadd.s32 %s171, 1
      %s173 = scalar_select %p170, %s171, %s172
      %p176 = pneg %p170
      %p177 = scmp.eq.s32.totalorder %s18, 7
      %p178 = por %p176, %p177
      %p179 = scmp.ne.s32.totalorder %s171, %s174
      %p180 = scmp.eq.s32.totalorder %s18, 0
      %p181 = por %p179, %p180
      %p182 = scmp.ne.s32.totalorder %s171, %s174
      %p183 = scmp.eq.s32.totalorder %s23, 7
      %p184 = por %p182, %p183
      %p185 = scmp.ne.s32.totalorder %s174, %s175
      %p186 = scmp.eq.s32.totalorder %s23, 0
      %p187 = por %p185, %p186
      %p188 = scmp.ne.s32.totalorder %s174, %s175
      %p189 = scmp.eq.s32.totalorder %s24, 7
      %p190 = por %p188, %p189
      %p192 = scmp.ne.s32.totalorder %s175, %s191
      %p193 = scmp.eq.s32.totalorder %s24, 0
      %p194 = por %p192, %p193
      %p195 = scmp.le.s32.totalorder 1, %s18
      %p196 = scmp.lt.s32.totalorder %s18, 9
      %p197 = pnand %p195, %p196
      %p198 = pneg %p197
      // Predicated region
      $region9: #{tpu_custom_call.1} parent=5 // pred_check
        _
      $region10: #{tpu_custom_call.1} parent=5 // pred_check_branch
        %200 = sbr.rel (%p197) target = $region12
      $region11: #{tpu_custom_call.1} parent=5 // pred_region
        %s201 = ssub.s32 %s18, 1
        // Predicated region
        $region13: #{tpu_custom_call.1} parent=11 // pred_check
          %p202 = pneg %p84
        $region14: #{tpu_custom_call.1} parent=11 // pred_check_branch
          %204 = sbr.rel (%p202) target = $region16
        $region15: #{tpu_custom_call.1} parent=11 // pred_region
          %s206 = ssub.s32 32, 32
          %207 = vsyncadd [#allocation8], %s206
          %s209 = sshll.u32 [#allocation7], 4
          %s210 = int_to_ptr.vmem [resolvable:$true] %s209
          %212 = dma.hbm_to_vmem [thread:$0]  %s1, 32, %s210, [#allocation8]
        $region16: #{tpu_custom_call.1} parent=11 // pred_fallthru
          _
        // Predicated region
        $region17: #{tpu_custom_call.1} parent=11 // pred_check
          %p213 = pneg %p105
        $region18: #{tpu_custom_call.1} parent=11 // pred_check_branch
          %215 = sbr.rel (%p213) target = $region20
        $region19: #{tpu_custom_call.1} parent=11 // pred_region
          _
        $region20: #{tpu_custom_call.1} parent=11 // pred_fallthru
          _
      $region12: #{tpu_custom_call.1} parent=5 // pred_fallthru
        _
      %p216 = scmp.lt.s32.totalorder %s18, 8
      // Predicated region
      $region21: #{tpu_custom_call.1} parent=5 // pred_check
        %p217 = pneg %p216
      $region22: #{tpu_custom_call.1} parent=5 // pred_check_branch
        %219 = sbr.rel (%p217) target = $region24
      $region23: #{tpu_custom_call.1} parent=5 // pred_region
        // Predicated region
        $region25: #{tpu_custom_call.1} parent=23 // pred_check
          %p220 = pneg %p57
        $region26: #{tpu_custom_call.1} parent=23 // pred_check_branch
          %222 = sbr.rel (%p220) target = $region28
        $region27: #{tpu_custom_call.1} parent=23 // pred_region
          %s223 = sand.u32 %s18, 1
          %s224 = scalar_lea.sflag [#allocation5], %s223
          %s225 = sand.u32 %s47, 1
          %s226 = smul.addr %s225, 32
          %s227 = scalar_lea.vmem [#allocation4], %s226
          %s228 = smul.u32 2, %s25
          %s230 = ssub.s32 512, 512
          %231 = vsyncadd %s224, %s230
          %s232 = smul.addr %s228, 2
          %s233 = smul.addr %s232, 128
          %s234 = scalar_lea.hbm %s0, %s233
          %s235 = sshll.u32 %s227, 4
          %s236 = int_to_ptr.vmem [resolvable:$true] %s235
          %241 = dma.hbm_to_vmem [thread:$0]  %s234, 512, %s236, %s224, 256, 256, 16
        $region28: #{tpu_custom_call.1} parent=23 // pred_fallthru
          _
        // Predicated region
        $region29: #{tpu_custom_call.1} parent=23 // pred_check
          %p242 = pneg %p127
        $region30: #{tpu_custom_call.1} parent=23 // pred_check_branch
          %244 = sbr.rel (%p242) target = $region32
        $region31: #{tpu_custom_call.1} parent=23 // pred_region
          %s245 = sand.u32 %s18, 1
          %s246 = scalar_lea.sflag [#allocation5], %s245
          %s247 = sand.u32 %s117, 1
          %s248 = smul.addr %s247, 128
          %s249 = scalar_lea.vmem [#allocation9], %s248
          %s250 = smul.u32 16, %s27
          %s252 = ssub.s32 2048, 2048
          %253 = vsyncadd %s246, %s252
          %s254 = smul.addr %s250, 2
          %s255 = sadd.s32 %s26, %s254
          %s256 = smul.addr %s255, 128
          %s257 = scalar_lea.hbm %s3, %s256
          %s258 = sshll.u32 %s249, 4
          %s259 = int_to_ptr.vmem [resolvable:$true] %s258
          %264 = dma.hbm_to_vmem [thread:$0]  %s257, 2048, %s259, %s246, 256, 128, 8
        $region32: #{tpu_custom_call.1} parent=23 // pred_fallthru
          _
        // Predicated region
        $region33: #{tpu_custom_call.1} parent=23 // pred_check
          %p265 = pneg %p153
        $region34: #{tpu_custom_call.1} parent=23 // pred_check_branch
          %267 = sbr.rel (%p265) target = $region36
        $region35: #{tpu_custom_call.1} parent=23 // pred_region
          %p268 = scmp.lt.s32.totalorder %s26, 1
          %s269 = scalar_select %p268, %s26, 1
          %s270 = scalar_lea.vmem %s4, %s269
        $region36: #{tpu_custom_call.1} parent=23 // pred_fallthru
          _
      $region24: #{tpu_custom_call.1} parent=5 // pred_fallthru
        _
      %p271 = scmp.le.s32.totalorder 1, %s18
      %p272 = scmp.lt.s32.totalorder %s18, 9
      %p273 = pnand %p271, %p272
      %p274 = pneg %p273
      // Predicated region
      $region37: #{tpu_custom_call.1} parent=5 // pred_check
        _
      $region38: #{tpu_custom_call.1} parent=5 // pred_check_branch
        %276 = sbr.rel (%p273) target = $region40
      $region39: #{tpu_custom_call.1} parent=5 // pred_region
        %s277 = ssub.s32 %s18, 1
        %s278 = sand.u32 %s23, 1
        %s279 = scalar_lea.sflag [#allocation5], %s278
        %s280 = sand.u32 %s50, 1
        %s281 = smul.addr %s280, 32
        %s282 = scalar_lea.vmem [#allocation4], %s281
        // Predicated region
        $region41: #{tpu_custom_call.1} parent=39 // pred_check
          %p283 = pneg %p63
        $region42: #{tpu_custom_call.1} parent=39 // pred_check_branch
          %285 = sbr.rel (%p283) target = $region44
        $region43: #{tpu_custom_call.1} parent=39 // pred_region
          %286 = dma.done %s279, 512
        $region44: #{tpu_custom_call.1} parent=39 // pred_fallthru
          _
        // Predicated region
        $region45: #{tpu_custom_call.1} parent=39 // pred_check
          %p287 = pneg %p84
        $region46: #{tpu_custom_call.1} parent=39 // pred_check_branch
          %289 = sbr.rel (%p287) target = $region48
        $region47: #{tpu_custom_call.1} parent=39 // pred_region
          %290 = dma.done [#allocation8], 32
        $region48: #{tpu_custom_call.1} parent=39 // pred_fallthru
          _
        %s291 = sand.u32 %s23, 1
        %s292 = scalar_lea.sflag [#allocation5], %s291
        %s293 = sand.u32 %s120, 1
        %s294 = smul.addr %s293, 128
        %s295 = scalar_lea.vmem [#allocation9], %s294
        // Predicated region
        $region49: #{tpu_custom_call.1} parent=39 // pred_check
          %p296 = pneg %p133
        $region50: #{tpu_custom_call.1} parent=39 // pred_check_branch
          %298 = sbr.rel (%p296) target = $region52
        $region51: #{tpu_custom_call.1} parent=39 // pred_region
          %299 = dma.done %s292, 2048
        $region52: #{tpu_custom_call.1} parent=39 // pred_fallthru
          _
        %s300 = sand.u32 %s23, 1
        %s301 = scalar_lea.sflag [#allocation5], %s300
        %s302 = sand.u32 %s50, 1
        %s303 = smul.addr %s302, 32
        %s304 = scalar_lea.vmem [#allocation4], %s303
        %p305 = pneg %p63
        %p306 = pneg %p60
        %p307 = pneg %p84
        %p308 = pneg %p81
        %p309 = pneg %p105
        %p310 = pneg %p102
        %s311 = sand.u32 %s23, 1
        %s312 = scalar_lea.sflag [#allocation5], %s311
        %s313 = sand.u32 %s120, 1
        %s314 = smul.addr %s313, 128
        %s315 = scalar_lea.vmem [#allocation9], %s314
        %p316 = pneg %p133
        %p317 = pneg %p130
        %p318 = scmp.lt.s32.totalorder %s29, 1
        %s319 = scalar_select %p318, %s29, 1
        %s320 = scalar_lea.vmem %s4, %s319
        %p321 = pneg %p159
        %p322 = pneg %p156
        %p323 = pneg %p187
        %p324 = pneg %p184
        %s325 = sand.u32 %s174, 1
        %s326 = scalar_lea.sflag [#allocation6], %s325
        %s327 = sand.u32 %s174, 1
        %s328 = smul.addr %s327, 16
        %s329 = scalar_lea.vmem [#allocation10], %s328
        %s330 = smul.u32 2, %s28
        %s331 = smul.u32 16, %s30
        %p332 = scmp.lt.s32.totalorder %s29, 1
        %s333 = scalar_select %p332, %s29, 1
        %s334 = scalar_lea.vmem %s4, %s333
        %s335 = smul.u32 2, %s28
        %p336 = scmp.eq.s32.totalorder %s29, 0
        %p337 = scmp.eq.s32.totalorder %s30, 0
        %p338 = pnand %p336, %p337
        %p339 = pneg %p338
        // Predicated region
        $region53: #{tpu_custom_call.1} parent=39 // pred_check
          _
        $region54: #{tpu_custom_call.1} parent=39 // pred_check_branch
          %341 = sbr.rel (%p338) target = $region56
        $region55: #{tpu_custom_call.1} parent=39 // pred_region
          %v342 = vld [vmem:[%s282] sm:$0xff]
          %v343 = vld [vmem:[%s282 + $0x8] sm:$0xff]
          %v344 = vld [vmem:[%s282 + $0x10] sm:$0xff]
          %v345 = vld [vmem:[%s282 + $0x18] sm:$0xff]
          %v346 = vadd.f32 %v342, %v343
          %347 = vadd.xlane.f32.xlu0 %v346
          %v348 = vpop.xlane.xlu0 %347
          %v349 = vadd.f32 %v344, %v345
          %350 = vadd.xlane.f32.xlu0 %v349
          %v351 = vpop.xlane.xlu0 %350
          %v352 = vmul.f32 %v348, 0.00390625
          %v353 = vmul.f32 %v351, 0.00390625
          %v354 = vsub.f32 %v342, %v352
          %v355 = vsub.f32 %v343, %v352
          %v356 = vsub.f32 %v344, %v353
          %v357 = vsub.f32 %v345, %v353
          %v358 = vmul.f32 %v354, %v354
          %v359 = vmul.f32 %v355, %v355
          %v360 = vmul.f32 %v356, %v356
          %v361 = vmul.f32 %v357, %v357
          %v362 = vadd.f32 %v358, %v359
          %363 = vadd.xlane.f32.xlu0 %v362
          %v364 = vpop.xlane.xlu0 %363
          %v365 = vadd.f32 %v360, %v361
          %366 = vadd.xlane.f32.xlu0 %v365
          %v367 = vpop.xlane.xlu0 %366
          %v368 = vmul.f32 %v364, 0.00390625
          %v369 = vmul.f32 %v367, 0.00390625
          %v370 = vadd.f32 %v368, 1e-05
          %v371 = vadd.f32 %v369, 1e-05
          %v372 = vrsqrt.pop %v370
          %v373 = vrsqrt.pop %v371
          %v374 = vmul.f32 %v354, %v372
          %v375 = vmul.f32 %v355, %v372
          %v376 = vmul.f32 %v356, %v373
          %v377 = vmul.f32 %v357, %v373
          %v378 = vld [vmem:[#allocation7] sm:$0x3]
          %v380 = vlaneseq
          %v381 = vshrl.u32 %v380, 7
          %v382 = vsub.s32 0, %v381
          %v383 = vrot.slane %v378, %v382
          %v384 = vlaneseq
          %v385 = vshrl.u32 %v384, 7
          %v386 = vsub.s32 1, %v385
          %v387 = vrot.slane %v378, %v386
          %v390 = vmul.f32 %v374, %v383
          %v391 = vmul.f32 %v375, %v387
          %v392 = vmul.f32 %v376, %v383
          %v393 = vmul.f32 %v377, %v387
          %v394 = vld [vmem:[%s2] sm:$0x3]
          %v396 = vlaneseq
          %v397 = vshrl.u32 %v396, 7
          %v398 = vsub.s32 0, %v397
          %v399 = vrot.slane %v394, %v398
          %v400 = vlaneseq
          %v401 = vshrl.u32 %v400, 7
          %v402 = vsub.s32 1, %v401
          %v403 = vrot.slane %v394, %v402
          %v406 = vadd.f32 %v390, %v399
          %v407 = vadd.f32 %v391, %v403
          %v408 = vadd.f32 %v392, %v399
          %v409 = vadd.f32 %v393, %v403
          %410 = vst [vmem:[#allocation2] sm:$0xff] %v406
          %411 = vst [vmem:[#allocation2 + $0x8] sm:$0xff] %v407
          %412 = vst [vmem:[#allocation2 + $0x10] sm:$0xff] %v408
          %413 = vst [vmem:[#allocation2 + $0x18] sm:$0xff] %v409
        $region56: #{tpu_custom_call.1} parent=39 // pred_fallthru
          _
        // Predicated region
        $region57: #{tpu_custom_call.1} parent=39 // pred_check
          %p414 = pneg %p337
        $region58: #{tpu_custom_call.1} parent=39 // pred_check_branch
          %416 = sbr.rel (%p414) target = $region60
        $region59: #{tpu_custom_call.1} parent=39 // pred_region
          %417 = vst [vmem:[#allocation3] sm:$0xff] 0.0
          %418 = vst [vmem:[#allocation3 + $0x8] sm:$0xff] 0.0
        $region60: #{tpu_custom_call.1} parent=39 // pred_fallthru
          _
        %s419 = smul.u32 %s30, 128
        %v420 = vld [vmem:[#allocation3] sm:$0xff]
        %v421 = vld [vmem:[#allocation3 + $0x8] sm:$0xff]
        %s422 = sshra.s32 %s419, 7
        %s423 = sand.u32 %s419, 127
        %s424 = smul.addr %s422, 8
        %s425 = scalar_lea.vmem [#allocation2], %s424
        %v426 = vld [vmem:[%s425] sm:$0xff]
        %v427 = vld [vmem:[%s425 + $0x10] sm:$0xff]
        %v428 = vld [vmem:[%s295] sm:$0xff]
        %v429 = vld [vmem:[%s295 + $0x8] sm:$0xff]
        %v430 = vld [vmem:[%s295 + $0x10] sm:$0xff]
        %v431 = vld [vmem:[%s295 + $0x18] sm:$0xff]
        %v432 = vld [vmem:[%s295 + $0x20] sm:$0xff]
        %v433 = vld [vmem:[%s295 + $0x28] sm:$0xff]
        %v434 = vld [vmem:[%s295 + $0x30] sm:$0xff]
        %v435 = vld [vmem:[%s295 + $0x38] sm:$0xff]
        %v436 = vld [vmem:[%s295 + $0x40] sm:$0xff]
        %v437 = vld [vmem:[%s295 + $0x48] sm:$0xff]
        %v438 = vld [vmem:[%s295 + $0x50] sm:$0xff]
        %v439 = vld [vmem:[%s295 + $0x58] sm:$0xff]
        %v440 = vld [vmem:[%s295 + $0x60] sm:$0xff]
        %v441 = vld [vmem:[%s295 + $0x68] sm:$0xff]
        %v442 = vld [vmem:[%s295 + $0x70] sm:$0xff]
        %v443 = vld [vmem:[%s295 + $0x78] sm:$0xff]
        %444 = vmatprep.subr.mxu0 0.0
        %445 = vmatpush1.msra.mxu0 %v443
        %446 = vmatprep.subr.mxu0 0.0
        %447 = vmatpush1.msra.mxu0 %v442
        %448 = vmatprep.subr.mxu0 0.0
        %449 = vmatpush1.msra.mxu0 %v441
        %450 = vmatprep.subr.mxu0 0.0
        %451 = vmatpush1.msra.mxu0 %v440
        %452 = vmatprep.subr.mxu0 0.0
        %453 = vmatpush1.msra.mxu0 %v439
        %454 = vmatprep.subr.mxu0 0.0
        %455 = vmatpush1.msra.mxu0 %v438
        %456 = vmatprep.subr.mxu0 0.0
        %457 = vmatpush1.msra.mxu0 %v437
        %458 = vmatprep.subr.mxu0 0.0
        %459 = vmatpush1.msra.mxu0 %v436
        %460 = vmatprep.subr.mxu0 0.0
        %461 = vmatpush1.msra.mxu0 %v435
        %462 = vmatprep.subr.mxu0 0.0
        %463 = vmatpush1.msra.mxu0 %v434
        %464 = vmatprep.subr.mxu0 0.0
        %465 = vmatpush1.msra.mxu0 %v433
        %466 = vmatprep.subr.mxu0 0.0
        %467 = vmatpush1.msra.mxu0 %v432
        %468 = vmatprep.subr.mxu0 0.0
        %469 = vmatpush1.msra.mxu0 %v431
        %470 = vmatprep.subr.mxu0 0.0
        %471 = vmatpush1.msra.mxu0 %v430
        %472 = vmatprep.subr.mxu0 0.0
        %473 = vmatpush1.msra.mxu0 %v429
        %474 = vmatprep.subr.mxu0 0.0
        %475 = vmatpush1.msra.mxu0 %v428
        %476 = vmatprep.subr.mxu0 0.0
        %477 = vmatpush2.msra.mxu0 0.0
        %478 = vmatprep.subr.mxu0 0.0
        %479 = vmatpush2.msra.mxu0 0.0
        %480 = vmatprep.subr.mxu0 0.0
        %481 = vmatpush2.msra.mxu0 0.0
        %482 = vmatprep.subr.mxu0 0.0
        %483 = vmatpush2.msra.mxu0 0.0
        %484 = vmatprep.subr.mxu0 0.0
        %485 = vmatpush2.msra.mxu0 0.0
        %486 = vmatprep.subr.mxu0 0.0
        %487 = vmatpush2.msra.mxu0 0.0
        %488 = vmatprep.subr.mxu0 0.0
        %489 = vmatpush2.msra.mxu0 0.0
        %490 = vmatprep.subr.mxu0 0.0
        %491 = vmatpush2.msra.mxu0 0.0
        %492 = vmatprep.subr.mxu0 0.0
        %493 = vmatpush2.msra.mxu0 0.0
        %494 = vmatprep.subr.mxu0 0.0
        %495 = vmatpush2.msra.mxu0 0.0
        %496 = vmatprep.subr.mxu0 0.0
        %497 = vmatpush2.msra.mxu0 0.0
        %498 = vmatprep.subr.mxu0 0.0
        %499 = vmatpush2.msra.mxu0 0.0
        %500 = vmatprep.subr.mxu0 0.0
        %501 = vmatpush2.msra.mxu0 0.0
        %502 = vmatprep.subr.mxu0 0.0
        %503 = vmatpush2.msra.mxu0 0.0
        %504 = vmatprep.subr.mxu0 0.0
        %505 = vmatpush2.msra.mxu0 0.0
        %506 = vmatprep.subr.mxu0 0.0
        %507 = vmatpush2.msra.mxu0 0.0
        %508 = vmatprep.mubr.f32.mxu0 0.0
        %509 = vmatmul.mubr.f32.gmra.mxu0 %v426
        %v510 = vpop.f32.mrf.mxu0
        %v511 = vadd.f32 0.0, %v510
        %v512 = vpop.f32.mrf.mxu0
        %513 = vmatprep.mubr.f32.mxu0 0.0
        %514 = vmatmul.mubr.f32.gmra.mxu0 %v427
        %v515 = vpop.f32.mrf.mxu0
        %v516 = vadd.f32 0.0, %v515
        %v517 = vpop.f32.mrf.mxu0
        %518 = vdwg.mxu0
        %v519 = vadd.f32 %v420, %v511
        %v520 = vadd.f32 %v421, %v516
        %521 = vst [vmem:[#allocation3] sm:$0xff] %v519
        %522 = vst [vmem:[#allocation3 + $0x8] sm:$0xff] %v520
        %p523 = scmp.eq.s32.totalorder %s30, 1
        // Predicated region
        $region61: #{tpu_custom_call.1} parent=39 // pred_check
          %p524 = pneg %p523
        $region62: #{tpu_custom_call.1} parent=39 // pred_check_branch
          %526 = sbr.rel (%p524) target = $region64
        $region63: #{tpu_custom_call.1} parent=39 // pred_region
          %v527 = vld [vmem:[#allocation3] sm:$0xff]
          %v528 = vld [vmem:[#allocation3 + $0x8] sm:$0xff]
          %v529 = vld [vmem:[%s334] sm:$0x1]
          %v531 = vlaneseq
          %v532 = vshrl.u32 %v531, 7
          %v533 = vsub.s32 0, %v532
          %v534 = vrot.slane %v529, %v533
          %v536 = vadd.f32 %v527, %v534
          %v537 = vadd.f32 %v528, %v534
          %538 = vst [vmem:[%s329] sm:$0xff] %v536
          %539 = vst [vmem:[%s329 + $0x8] sm:$0xff] %v537
        $region64: #{tpu_custom_call.1} parent=39 // pred_fallthru
          _
        %s540 = sand.u32 %s174, 1
        %s541 = scalar_lea.sflag [#allocation6], %s540
        %s542 = sand.u32 %s174, 1
        %s543 = smul.addr %s542, 16
        %s544 = scalar_lea.vmem [#allocation10], %s543
        // Predicated region
        $region65: #{tpu_custom_call.1} parent=39 // pred_check
          %p545 = pneg %p184
        $region66: #{tpu_custom_call.1} parent=39 // pred_check_branch
          %547 = sbr.rel (%p545) target = $region68
        $region67: #{tpu_custom_call.1} parent=39 // pred_region
          %s548 = smul.u32 2, %s28
          %s550 = ssub.s32 256, 256
          %551 = vsyncadd %s541, %s550
          %s552 = smul.addr %s548, 2
          %s553 = sadd.s32 %s29, %s552
          %s554 = smul.addr %s553, 128
          %s555 = scalar_lea.hbm %s5, %s554
          %s556 = sshll.u32 %s544, 4
          %s557 = int_to_ptr.vmem [resolvable:$true] %s556
          %562 = dma.vmem_to_hbm [thread:$0]  %s557, 256, %s555, %s541, 128, 256, 8
        $region68: #{tpu_custom_call.1} parent=39 // pred_fallthru
          _
      $region40: #{tpu_custom_call.1} parent=5 // pred_fallthru
        _
      %p563 = scmp.le.s32.totalorder 2, %s18
      // Predicated region
      $region69: #{tpu_custom_call.1} parent=5 // pred_check
        %p564 = pneg %p563
      $region70: #{tpu_custom_call.1} parent=5 // pred_check_branch
        %566 = sbr.rel (%p564) target = $region72
      $region71: #{tpu_custom_call.1} parent=5 // pred_region
        %s567 = ssub.s32 %s18, 2
        // Predicated region
        $region73: #{tpu_custom_call.1} parent=71 // pred_check
          %p568 = pneg %p190
        $region74: #{tpu_custom_call.1} parent=71 // pred_check_branch
          %570 = sbr.rel (%p568) target = $region76
        $region75: #{tpu_custom_call.1} parent=71 // pred_region
          %s571 = sand.u32 %s175, 1
          %s572 = scalar_lea.sflag [#allocation6], %s571
          %s573 = sand.u32 %s175, 1
          %s574 = smul.addr %s573, 16
          %s575 = scalar_lea.vmem [#allocation10], %s574
          %576 = dma.done %s572, 256
        $region76: #{tpu_custom_call.1} parent=71 // pred_fallthru
          _
      $region72: #{tpu_custom_call.1} parent=5 // pred_fallthru
        _
    $region6: #{tpu_custom_call.1} parent=1 // loop_footer
      %s22 = sadd.s32 1, %s18
    $region7: #{tpu_custom_call.1} parent=1 // loop_footer_branch
      %17 = sbr.rel target = $region3
    $region8: #{tpu_custom_call.1} parent=1 // loop_exit
      _
    %577 = vsyncpa [#allocation5], 1
    %s578 = scalar_lea.sflag [#allocation5], 1
    %579 = vsyncpa %s578, 1
    %580 = vsyncpa [#allocation8], 1
    %581 = vsyncpa [#allocation6], 1
    %s582 = scalar_lea.sflag [#allocation6], 1
    %583 = vsyncpa %s582, 1

</llo_original>
